<compile_context>
chip_gen: v5e
topology: v5e:2x2
jax: 0.10.0
libtpu: 0.0.40
codegen_flags: <defaults>
</compile_context>

<pallas_src>
import jax
import jax.numpy as jnp
from jax.experimental import pallas as pl
from jax.experimental.pallas import tpu as pltpu

INPUT_SIZE = 3
HIDDEN_SIZE = 5
OUTPUT_SIZE = 2

_LANES = 128                       # vreg lane width
_SUBLANES = 8                      # vreg sublanes (f32)
_CHUNK = _LANES * _SUBLANES        # 1024 columns: minimal (8,128)-aligned batch unit
_MAX_TILE_CHUNKS = 256             # 256 * 1024 = 262144 cols -> ~5 MB in+out per tile
_MEGACORE_BLOCKS = 4               # target >=4 grid blocks so v7x's 2 TCs load-balance
_MIN_TILE_CHUNKS = 16              # only split for megacore if blocks stay >=16K cols


def _cdiv(a, b):
    return (a + b - 1) // b


def _plan_tiling(batch):
    """Return (b_pad, tile_cols, n_blocks); tile_cols is a multiple of 1024 and
    b_pad == n_blocks * tile_cols, with over-padding limited to a few 1024-chunks."""
    n_chunks = max(1, _cdiv(batch, _CHUNK))
    n_blocks = _cdiv(n_chunks, _MAX_TILE_CHUNKS)
    # Give the two v7x TensorCores several independent blocks when there is enough
    # work for the per-step overhead (~0.35us) to stay negligible.
    if n_blocks < _MEGACORE_BLOCKS and n_chunks >= _MEGACORE_BLOCKS * _MIN_TILE_CHUNKS:
        n_blocks = _MEGACORE_BLOCKS
    chunks_per_tile = _cdiv(n_chunks, n_blocks)
    tile_cols = chunks_per_tile * _CHUNK
    b_pad = n_blocks * tile_cols
    return b_pad, tile_cols, n_blocks


def mlp_kernel(w1_ref, b1_ref, w2_ref, b2_ref, x_ref, o_ref):
    """x_ref: (IN, TR, 128) VMEM tile — each feature row is a dense (TR,128) slab.
    Weights/biases are flat SMEM scalars (PyTorch (out, in) order, row-major).
    o_ref: (OUT, TR, 128) VMEM tile, written one dense slab per output feature."""
    xs = [x_ref[i] for i in range(INPUT_SIZE)]            # 3 dense (TR, 128) slabs

    # fc1 + ReLU: h[j] = relu(b1[j] + sum_i w1[j, i] * x[i])
    h = []
    for j in range(HIDDEN_SIZE):
        acc = b1_ref[j] + w1_ref[j * INPUT_SIZE + 0] * xs[0]
        for i in range(1, INPUT_SIZE):
            acc = acc + w1_ref[j * INPUT_SIZE + i] * xs[i]
        h.append(jnp.maximum(acc, 0.0))                    # (TR, 128)

    # fc2: y[k] = b2[k] + sum_j w2[k, j] * h[j]  -> direct lane-dense store per row
    for k in range(OUTPUT_SIZE):
        acc = b2_ref[k] + w2_ref[k * HIDDEN_SIZE + 0] * h[0]
        for j in range(1, HIDDEN_SIZE):
            acc = acc + w2_ref[k * HIDDEN_SIZE + j] * h[j]
        o_ref[k] = acc                                     # unmasked full-vreg stores


def two_layer_forward_feature_major(x_fm, w1, b1, w2, b2):
    """Feature-major entry point (no wrapper transposes).
       x_fm: (INPUT_SIZE, B) f32, batch on the trailing (lane) axis.
       Weights in PyTorch layout: w1 (HIDDEN, IN), b1 (HIDDEN,), w2 (OUT, HIDDEN), b2 (OUT,).
       Returns (OUTPUT_SIZE, B) f32."""
    assert x_fm.shape[0] == INPUT_SIZE
    batch = x_fm.shape[1]
    b_pad, tile_cols, n_blocks = _plan_tiling(batch)

    x_fm = x_fm.astype(jnp.float32)
    if b_pad != batch:
        x_fm = jnp.pad(x_fm, ((0, 0), (0, b_pad - batch)))

    rows = b_pad // _LANES           # total sublane-rows of the dense layout
    tr = tile_cols // _LANES         # sublane-rows per batch tile (multiple of 8)
    x3 = x_fm.reshape(INPUT_SIZE, rows, _LANES)            # free, contiguous reshape

    flops = 2 * b_pad * (INPUT_SIZE * HIDDEN_SIZE + HIDDEN_SIZE * OUTPUT_SIZE)
    bytes_accessed = 4 * (b_pad * (INPUT_SIZE + OUTPUT_SIZE)
                          + HIDDEN_SIZE * (INPUT_SIZE + 1)
                          + OUTPUT_SIZE * (HIDDEN_SIZE + 1))

    out3 = pl.pallas_call(
        mlp_kernel,
        out_shape=jax.ShapeDtypeStruct((OUTPUT_SIZE, rows, _LANES), jnp.float32),
        grid=(n_blocks,),
        in_specs=[
            pl.BlockSpec(memory_space=pltpu.SMEM),                     # w1 flat (15,)
            pl.BlockSpec(memory_space=pltpu.SMEM),                     # b1 (5,)
            pl.BlockSpec(memory_space=pltpu.SMEM),                     # w2 flat (10,)
            pl.BlockSpec(memory_space=pltpu.SMEM),                     # b2 (2,)
            pl.BlockSpec((INPUT_SIZE, tr, _LANES), lambda i: (0, i, 0)),   # x batch tile
        ],
        out_specs=pl.BlockSpec((OUTPUT_SIZE, tr, _LANES), lambda i: (0, i, 0)),
        compiler_params=pltpu.CompilerParams(
            dimension_semantics=("parallel",),   # independent batch tiles (v7x: 2 TCs)
            vmem_limit_bytes=48 * 1024 * 1024,   # > working set (~20 MiB), < v7x 64 MiB phys
        ),
        cost_estimate=pl.CostEstimate(
            flops=flops, transcendentals=0, bytes_accessed=bytes_accessed),
    )(w1.astype(jnp.float32).reshape(-1), b1.astype(jnp.float32),
      w2.astype(jnp.float32).reshape(-1), b2.astype(jnp.float32), x3)

    return out3.reshape(OUTPUT_SIZE, b_pad)[:, :batch]


def two_layer_forward(x, w1, b1, w2, b2):
    """PyTorch-facing wrapper: x (B, INPUT_SIZE) -> (B, OUTPUT_SIZE) == fc2(relu(fc1(x))).
    Only adds a thin transpose around the feature-major kernel; callers that can hold
    their activations feature-major should use two_layer_forward_feature_major directly."""
    out_fm = two_layer_forward_feature_major(x.astype(jnp.float32).T, w1, b1, w2, b2)
    return out_fm.T


def init_params(key):
    """Deterministic init mimicking PyTorch nn.Linear default (uniform +/- 1/sqrt(fan_in)),
    stored in PyTorch (out_features, in_features) layout."""
    k1, k2, k3, k4 = jax.random.split(key, 4)
    bound1 = 1.0 / (INPUT_SIZE ** 0.5)
    bound2 = 1.0 / (HIDDEN_SIZE ** 0.5)
    w1 = jax.random.uniform(k1, (HIDDEN_SIZE, INPUT_SIZE), jnp.float32, -bound1, bound1)
    b1 = jax.random.uniform(k2, (HIDDEN_SIZE,), jnp.float32, -bound1, bound1)
    w2 = jax.random.uniform(k3, (OUTPUT_SIZE, HIDDEN_SIZE), jnp.float32, -bound2, bound2)
    b2 = jax.random.uniform(k4, (OUTPUT_SIZE,), jnp.float32, -bound2, bound2)
    return w1, b1, w2, b2


def _reference(x, w1, b1, w2, b2):
    return jnp.maximum(x @ w1.T + b1, 0.0) @ w2.T + b2


if __name__ == "__main__":
    key = jax.random.PRNGKey(0)
    k_x, k_p, k_x2 = jax.random.split(key, 3)
    w1, b1, w2, b2 = init_params(k_p)

    # Small-shape check (matches the module spec: 3 -> 5 -> 2).
    batch = 8
    x = jax.random.normal(k_x, (batch, INPUT_SIZE), dtype=jnp.float32)
    out = jax.block_until_ready(two_layer_forward(x, w1, b1, w2, b2))
    ref = _reference(x, w1, b1, w2, b2)
    assert out.shape == (batch, OUTPUT_SIZE)
    assert jnp.allclose(out, ref, atol=1e-5, rtol=1e-5), \
        "mismatch vs. JAX reference (small batch)"

    # Feature-major entry point agrees with the PyTorch-layout wrapper.
    out_fm = jax.block_until_ready(
        two_layer_forward_feature_major(x.T, w1, b1, w2, b2))
    assert jnp.allclose(out_fm.T, ref, atol=1e-5, rtol=1e-5), \
        "mismatch between feature-major and wrapper paths"

    # Larger ragged batch exercises the multi-block grid + padding path.
    batch2 = 3000
    x2 = jax.random.normal(k_x2, (batch2, INPUT_SIZE), dtype=jnp.float32)
    out2 = jax.block_until_ready(two_layer_forward(x2, w1, b1, w2, b2))
    assert out2.shape == (batch2, OUTPUT_SIZE)
    assert jnp.allclose(out2, _reference(x2, w1, b1, w2, b2), atol=1e-5, rtol=1e-5), \
        "mismatch vs. JAX reference (tiled batch)"

    print("KERNEL_OK")
</pallas_src>

<mosaic_0001>
module attributes {stable_mosaic.version = 11 : i64} {
  func.func @mlp_kernel(%arg0: i32, %arg1: memref<15xf32, #tpu.memory_space<smem>>, %arg2: memref<5xf32, #tpu.memory_space<smem>>, %arg3: memref<10xf32, #tpu.memory_space<smem>>, %arg4: memref<2xf32, #tpu.memory_space<smem>>, %arg5: memref<3x8x128xf32, #tpu.memory_space<vmem>>, %arg6: memref<2x8x128xf32, #tpu.memory_space<vmem>>) attributes {dimension_semantics = [#tpu.dimension_semantics<parallel>], iteration_bounds = array<i64: 1>, scalar_prefetch = 0 : i64, scratch_operands = 0 : i64, tpu.core_type = #tpu.core_type<tc>, window_params = [{transform_indices = @transform_0, window_bounds = array<i64: 15>}, {transform_indices = @transform_1, window_bounds = array<i64: 5>}, {transform_indices = @transform_2, window_bounds = array<i64: 10>}, {transform_indices = @transform_3, window_bounds = array<i64: 2>}, {transform_indices = @transform_4, window_bounds = array<i64: 3, 8, 128>}, {transform_indices = @transform_5, window_bounds = array<i64: 2, 8, 128>}]} {
    %c0 = arith.constant 0 : index
    %c0_0 = arith.constant 0 : index
    %c0_1 = arith.constant 0 : index
    %0 = vector.load %arg5[%c0, %c0_0, %c0_1] : memref<3x8x128xf32, #tpu.memory_space<vmem>>, vector<1x8x128xf32>
    %1 = vector.shape_cast %0 : vector<1x8x128xf32> to vector<8x128xf32>
    %c1 = arith.constant 1 : index
    %c0_2 = arith.constant 0 : index
    %c0_3 = arith.constant 0 : index
    %2 = vector.load %arg5[%c1, %c0_2, %c0_3] : memref<3x8x128xf32, #tpu.memory_space<vmem>>, vector<1x8x128xf32>
    %3 = vector.shape_cast %2 : vector<1x8x128xf32> to vector<8x128xf32>
    %c2 = arith.constant 2 : index
    %c0_4 = arith.constant 0 : index
    %c0_5 = arith.constant 0 : index
    %4 = vector.load %arg5[%c2, %c0_4, %c0_5] : memref<3x8x128xf32, #tpu.memory_space<vmem>>, vector<1x8x128xf32>
    %5 = vector.shape_cast %4 : vector<1x8x128xf32> to vector<8x128xf32>
    %c0_6 = arith.constant 0 : index
    %6 = memref.load %arg2[%c0_6] : memref<5xf32, #tpu.memory_space<smem>>
    %c0_7 = arith.constant 0 : index
    %7 = memref.load %arg1[%c0_7] : memref<15xf32, #tpu.memory_space<smem>>
    %8 = vector.broadcast %7 : f32 to vector<8x128xf32>
    %9 = arith.mulf %8, %1 : vector<8x128xf32>
    %10 = vector.broadcast %6 : f32 to vector<8x128xf32>
    %11 = arith.addf %10, %9 : vector<8x128xf32>
    %c1_8 = arith.constant 1 : index
    %12 = memref.load %arg1[%c1_8] : memref<15xf32, #tpu.memory_space<smem>>
    %13 = vector.broadcast %12 : f32 to vector<8x128xf32>
    %14 = arith.mulf %13, %3 : vector<8x128xf32>
    %15 = arith.addf %11, %14 : vector<8x128xf32>
    %c2_9 = arith.constant 2 : index
    %16 = memref.load %arg1[%c2_9] : memref<15xf32, #tpu.memory_space<smem>>
    %17 = vector.broadcast %16 : f32 to vector<8x128xf32>
    %18 = arith.mulf %17, %5 : vector<8x128xf32>
    %19 = arith.addf %15, %18 : vector<8x128xf32>
    %cst = arith.constant 0.000000e+00 : f32
    %20 = vector.broadcast %cst : f32 to vector<8x128xf32>
    %21 = arith.maximumf %19, %20 : vector<8x128xf32>
    %c1_10 = arith.constant 1 : index
    %22 = memref.load %arg2[%c1_10] : memref<5xf32, #tpu.memory_space<smem>>
    %c3 = arith.constant 3 : index
    %23 = memref.load %arg1[%c3] : memref<15xf32, #tpu.memory_space<smem>>
    %24 = vector.broadcast %23 : f32 to vector<8x128xf32>
    %25 = arith.mulf %24, %1 : vector<8x128xf32>
    %26 = vector.broadcast %22 : f32 to vector<8x128xf32>
    %27 = arith.addf %26, %25 : vector<8x128xf32>
    %c4 = arith.constant 4 : index
    %28 = memref.load %arg1[%c4] : memref<15xf32, #tpu.memory_space<smem>>
    %29 = vector.broadcast %28 : f32 to vector<8x128xf32>
    %30 = arith.mulf %29, %3 : vector<8x128xf32>
    %31 = arith.addf %27, %30 : vector<8x128xf32>
    %c5 = arith.constant 5 : index
    %32 = memref.load %arg1[%c5] : memref<15xf32, #tpu.memory_space<smem>>
    %33 = vector.broadcast %32 : f32 to vector<8x128xf32>
    %34 = arith.mulf %33, %5 : vector<8x128xf32>
    %35 = arith.addf %31, %34 : vector<8x128xf32>
    %cst_11 = arith.constant 0.000000e+00 : f32
    %36 = vector.broadcast %cst_11 : f32 to vector<8x128xf32>
    %37 = arith.maximumf %35, %36 : vector<8x128xf32>
    %c2_12 = arith.constant 2 : index
    %38 = memref.load %arg2[%c2_12] : memref<5xf32, #tpu.memory_space<smem>>
    %c6 = arith.constant 6 : index
    %39 = memref.load %arg1[%c6] : memref<15xf32, #tpu.memory_space<smem>>
    %40 = vector.broadcast %39 : f32 to vector<8x128xf32>
    %41 = arith.mulf %40, %1 : vector<8x128xf32>
    %42 = vector.broadcast %38 : f32 to vector<8x128xf32>
    %43 = arith.addf %42, %41 : vector<8x128xf32>
    %c7 = arith.constant 7 : index
    %44 = memref.load %arg1[%c7] : memref<15xf32, #tpu.memory_space<smem>>
    %45 = vector.broadcast %44 : f32 to vector<8x128xf32>
    %46 = arith.mulf %45, %3 : vector<8x128xf32>
    %47 = arith.addf %43, %46 : vector<8x128xf32>
    %c8 = arith.constant 8 : index
    %48 = memref.load %arg1[%c8] : memref<15xf32, #tpu.memory_space<smem>>
    %49 = vector.broadcast %48 : f32 to vector<8x128xf32>
    %50 = arith.mulf %49, %5 : vector<8x128xf32>
    %51 = arith.addf %47, %50 : vector<8x128xf32>
    %cst_13 = arith.constant 0.000000e+00 : f32
    %52 = vector.broadcast %cst_13 : f32 to vector<8x128xf32>
    %53 = arith.maximumf %51, %52 : vector<8x128xf32>
    %c3_14 = arith.constant 3 : index
    %54 = memref.load %arg2[%c3_14] : memref<5xf32, #tpu.memory_space<smem>>
    %c9 = arith.constant 9 : index
    %55 = memref.load %arg1[%c9] : memref<15xf32, #tpu.memory_space<smem>>
    %56 = vector.broadcast %55 : f32 to vector<8x128xf32>
    %57 = arith.mulf %56, %1 : vector<8x128xf32>
    %58 = vector.broadcast %54 : f32 to vector<8x128xf32>
    %59 = arith.addf %58, %57 : vector<8x128xf32>
    %c10 = arith.constant 10 : index
    %60 = memref.load %arg1[%c10] : memref<15xf32, #tpu.memory_space<smem>>
    %61 = vector.broadcast %60 : f32 to vector<8x128xf32>
    %62 = arith.mulf %61, %3 : vector<8x128xf32>
    %63 = arith.addf %59, %62 : vector<8x128xf32>
    %c11 = arith.constant 11 : index
    %64 = memref.load %arg1[%c11] : memref<15xf32, #tpu.memory_space<smem>>
    %65 = vector.broadcast %64 : f32 to vector<8x128xf32>
    %66 = arith.mulf %65, %5 : vector<8x128xf32>
    %67 = arith.addf %63, %66 : vector<8x128xf32>
    %cst_15 = arith.constant 0.000000e+00 : f32
    %68 = vector.broadcast %cst_15 : f32 to vector<8x128xf32>
    %69 = arith.maximumf %67, %68 : vector<8x128xf32>
    %c4_16 = arith.constant 4 : index
    %70 = memref.load %arg2[%c4_16] : memref<5xf32, #tpu.memory_space<smem>>
    %c12 = arith.constant 12 : index
    %71 = memref.load %arg1[%c12] : memref<15xf32, #tpu.memory_space<smem>>
    %72 = vector.broadcast %71 : f32 to vector<8x128xf32>
    %73 = arith.mulf %72, %1 : vector<8x128xf32>
    %74 = vector.broadcast %70 : f32 to vector<8x128xf32>
    %75 = arith.addf %74, %73 : vector<8x128xf32>
    %c13 = arith.constant 13 : index
    %76 = memref.load %arg1[%c13] : memref<15xf32, #tpu.memory_space<smem>>
    %77 = vector.broadcast %76 : f32 to vector<8x128xf32>
    %78 = arith.mulf %77, %3 : vector<8x128xf32>
    %79 = arith.addf %75, %78 : vector<8x128xf32>
    %c14 = arith.constant 14 : index
    %80 = memref.load %arg1[%c14] : memref<15xf32, #tpu.memory_space<smem>>
    %81 = vector.broadcast %80 : f32 to vector<8x128xf32>
    %82 = arith.mulf %81, %5 : vector<8x128xf32>
    %83 = arith.addf %79, %82 : vector<8x128xf32>
    %cst_17 = arith.constant 0.000000e+00 : f32
    %84 = vector.broadcast %cst_17 : f32 to vector<8x128xf32>
    %85 = arith.maximumf %83, %84 : vector<8x128xf32>
    %c0_18 = arith.constant 0 : index
    %86 = memref.load %arg4[%c0_18] : memref<2xf32, #tpu.memory_space<smem>>
    %c0_19 = arith.constant 0 : index
    %87 = memref.load %arg3[%c0_19] : memref<10xf32, #tpu.memory_space<smem>>
    %88 = vector.broadcast %87 : f32 to vector<8x128xf32>
    %89 = arith.mulf %88, %21 : vector<8x128xf32>
    %90 = vector.broadcast %86 : f32 to vector<8x128xf32>
    %91 = arith.addf %90, %89 : vector<8x128xf32>
    %c1_20 = arith.constant 1 : index
    %92 = memref.load %arg3[%c1_20] : memref<10xf32, #tpu.memory_space<smem>>
    %93 = vector.broadcast %92 : f32 to vector<8x128xf32>
    %94 = arith.mulf %93, %37 : vector<8x128xf32>
    %95 = arith.addf %91, %94 : vector<8x128xf32>
    %c2_21 = arith.constant 2 : index
    %96 = memref.load %arg3[%c2_21] : memref<10xf32, #tpu.memory_space<smem>>
    %97 = vector.broadcast %96 : f32 to vector<8x128xf32>
    %98 = arith.mulf %97, %53 : vector<8x128xf32>
    %99 = arith.addf %95, %98 : vector<8x128xf32>
    %c3_22 = arith.constant 3 : index
    %100 = memref.load %arg3[%c3_22] : memref<10xf32, #tpu.memory_space<smem>>
    %101 = vector.broadcast %100 : f32 to vector<8x128xf32>
    %102 = arith.mulf %101, %69 : vector<8x128xf32>
    %103 = arith.addf %99, %102 : vector<8x128xf32>
    %c4_23 = arith.constant 4 : index
    %104 = memref.load %arg3[%c4_23] : memref<10xf32, #tpu.memory_space<smem>>
    %105 = vector.broadcast %104 : f32 to vector<8x128xf32>
    %106 = arith.mulf %105, %85 : vector<8x128xf32>
    %107 = arith.addf %103, %106 : vector<8x128xf32>
    %c0_24 = arith.constant 0 : index
    %c0_25 = arith.constant 0 : index
    %c0_26 = arith.constant 0 : index
    %108 = vector.load %arg6[%c0_24, %c0_25, %c0_26] : memref<2x8x128xf32, #tpu.memory_space<vmem>>, vector<1x8x128xf32>
    %109 = vector.shape_cast %108 : vector<1x8x128xf32> to vector<8x128xf32>
    %110 = vector.shape_cast %107 : vector<8x128xf32> to vector<1x8x128xf32>
    tpu.vector_store %arg6[%c0_24, %c0_25, %c0_26], %110 {strides = array<i32>} : memref<2x8x128xf32, #tpu.memory_space<vmem>>, vector<1x8x128xf32>,
    %c1_27 = arith.constant 1 : index
    %111 = memref.load %arg4[%c1_27] : memref<2xf32, #tpu.memory_space<smem>>
    %c5_28 = arith.constant 5 : index
    %112 = memref.load %arg3[%c5_28] : memref<10xf32, #tpu.memory_space<smem>>
    %113 = vector.broadcast %112 : f32 to vector<8x128xf32>
    %114 = arith.mulf %113, %21 : vector<8x128xf32>
    %115 = vector.broadcast %111 : f32 to vector<8x128xf32>
    %116 = arith.addf %115, %114 : vector<8x128xf32>
    %c6_29 = arith.constant 6 : index
    %117 = memref.load %arg3[%c6_29] : memref<10xf32, #tpu.memory_space<smem>>
    %118 = vector.broadcast %117 : f32 to vector<8x128xf32>
    %119 = arith.mulf %118, %37 : vector<8x128xf32>
    %120 = arith.addf %116, %119 : vector<8x128xf32>
    %c7_30 = arith.constant 7 : index
    %121 = memref.load %arg3[%c7_30] : memref<10xf32, #tpu.memory_space<smem>>
    %122 = vector.broadcast %121 : f32 to vector<8x128xf32>
    %123 = arith.mulf %122, %53 : vector<8x128xf32>
    %124 = arith.addf %120, %123 : vector<8x128xf32>
    %c8_31 = arith.constant 8 : index
    %125 = memref.load %arg3[%c8_31] : memref<10xf32, #tpu.memory_space<smem>>
    %126 = vector.broadcast %125 : f32 to vector<8x128xf32>
    %127 = arith.mulf %126, %69 : vector<8x128xf32>
    %128 = arith.addf %124, %127 : vector<8x128xf32>
    %c9_32 = arith.constant 9 : index
    %129 = memref.load %arg3[%c9_32] : memref<10xf32, #tpu.memory_space<smem>>
    %130 = vector.broadcast %129 : f32 to vector<8x128xf32>
    %131 = arith.mulf %130, %85 : vector<8x128xf32>
    %132 = arith.addf %128, %131 : vector<8x128xf32>
    %c1_33 = arith.constant 1 : index
    %c0_34 = arith.constant 0 : index
    %c0_35 = arith.constant 0 : index
    %133 = vector.load %arg6[%c1_33, %c0_34, %c0_35] : memref<2x8x128xf32, #tpu.memory_space<vmem>>, vector<1x8x128xf32>
    %134 = vector.shape_cast %133 : vector<1x8x128xf32> to vector<8x128xf32>
    %135 = vector.shape_cast %132 : vector<8x128xf32> to vector<1x8x128xf32>
    tpu.vector_store %arg6[%c1_33, %c0_34, %c0_35], %135 {strides = array<i32>} : memref<2x8x128xf32, #tpu.memory_space<vmem>>, vector<1x8x128xf32>,
    return
  }
  func.func @transform_0(%arg0: i32) -> i32 {
    %c0_i32 = arith.constant 0 : i32
    %c0_i32_0 = arith.constant 0 : i32
    return %c0_i32 : i32
  }
  func.func @transform_1(%arg0: i32) -> i32 {
    %c0_i32 = arith.constant 0 : i32
    %c0_i32_0 = arith.constant 0 : i32
    return %c0_i32 : i32
  }
  func.func @transform_2(%arg0: i32) -> i32 {
    %c0_i32 = arith.constant 0 : i32
    %c0_i32_0 = arith.constant 0 : i32
    return %c0_i32 : i32
  }
  func.func @transform_3(%arg0: i32) -> i32 {
    %c0_i32 = arith.constant 0 : i32
    %c0_i32_0 = arith.constant 0 : i32
    return %c0_i32 : i32
  }
  func.func @transform_4(%arg0: i32) -> (i32, i32, i32) {
    %c0_i32 = arith.constant 0 : i32
    %c0_i32_0 = arith.constant 0 : i32
    %c0_i32_1 = arith.constant 0 : i32
    return %c0_i32, %arg0, %c0_i32_0 : i32, i32, i32
  }
  func.func @transform_5(%arg0: i32) -> (i32, i32, i32) {
    %c0_i32 = arith.constant 0 : i32
    %c0_i32_0 = arith.constant 0 : i32
    %c0_i32_1 = arith.constant 0 : i32
    return %c0_i32, %arg0, %c0_i32_0 : i32, i32, i32
  }
}

</mosaic_0001>

<llo_original>
// kernel: tpu_custom_call.1
$region0: #{tpu_custom_call.1}
  #allocation0 [shape = 'u32[]', space=smem, size = 0x4, offset = 0x4, fixed_abs, tag = 'smem constant byte address 0x4 - core index']
  #allocation1 [shape = 'u32[72,128]{1,0:T(1,128)}', space=vmem, size = 0x9000, scoped, tag = 'internal scratch']
  %s0 = inlined_call_operand.hbm [shape: f32[15], index: 0, kind: input, shape index: {}]
  %s1 = inlined_call_operand.hbm [shape: f32[5], index: 1, kind: input, shape index: {}]
  %s2 = inlined_call_operand.vmem [shape: f32[10], index: 2, kind: input, shape index: {}]
  %s3 = inlined_call_operand.vmem [shape: f32[2], index: 3, kind: input, shape index: {}]
  %s4 = inlined_call_operand.hbm [shape: f32[3,8,128], index: 4, kind: input, shape index: {}]
  %s5 = inlined_call_operand.hbm [shape: f32[2,8,128], index: 5, kind: output, shape index: {}]
  %s6 = sld [smem:[#allocation0]]
  $region50: #{tpu_custom_call.1} parent=0
    _
  %s8 = ssub.s32 1, %s6
  %s9 = scalar_select 0, %s8, %s6
  $region1: #{tpu_custom_call.1} parent=0
    #allocation2 [shape = 'u8[512]{0}', space=smem, size = 0x200, scoped, tag = 'input window, operand 0, single buffered']
    #allocation3 [shape = 's32[1]{0}', space=sflag, size = 0x4, scoped, tag = 'scoped memory for tpu_custom_call.1']
    #allocation4 [shape = 's32[1]{0}', space=sflag, size = 0x4, scoped, tag = 'scoped memory for tpu_custom_call.1']
    #allocation5 [shape = 's32[1]{0}', space=sflag, size = 0x4, scoped, tag = 'scoped memory for tpu_custom_call.1']
    #allocation6 [shape = 's32[1]{0}', space=sflag, size = 0x4, scoped, tag = 'scoped memory for tpu_custom_call.1']
    #allocation7 [shape = 'u8[512]{0}', space=smem, size = 0x200, scoped, tag = 'input window, operand 1, single buffered']
    #allocation8 [shape = 's32[1]{0}', space=sflag, size = 0x4, scoped, tag = 'scoped memory for tpu_custom_call.1']
    #allocation9 [shape = 'u8[512]{0}', space=smem, size = 0x200, scoped, tag = 'input window, operand 2, single buffered']
    #allocation10 [shape = 'u8[512]{0}', space=smem, size = 0x200, scoped, tag = 'input window, operand 3, single buffered']
    #allocation11 [shape = 's32[1]{0}', space=sflag, size = 0x4, scoped, tag = 'scoped memory for tpu_custom_call.1']
    #allocation12 [shape = 'u8[12288]{0}', space=vmem, size = 0x3000, scoped, tag = 'input window, operand 4, single buffered']
    #allocation13 [shape = 'u8[8192]{0}', space=vmem, size = 0x2000, scoped, tag = 'output window, operand 0, single buffered']
    %10 = vsyncpa [#allocation5], 0
    %11 = vsyncpa [#allocation8], 0
    %12 = vsyncpa [#allocation6], 0
    %13 = vsyncpa [#allocation11], 0
    %14 = vsyncpa [#allocation3], 0
    %15 = vsyncpa [#allocation4], 0
    // Predicated region
    $region2: #{tpu_custom_call.1} parent=1 // pred_check
      _
    $region3: #{tpu_custom_call.1} parent=1 // pred_check_branch
      %17 = sbr.rel (0) target = $region5
    $region4: #{tpu_custom_call.1} parent=1 // pred_region
      %19 = vsyncadd [#allocation5], 0
      %s21 = sshll.u32 %s0, 4
      %s22 = int_to_ptr.hbm [resolvable:$true] %s21
      %24 = dma.hbm_to_smem %s22, 16, [#allocation2], [#allocation5]
    $region5: #{tpu_custom_call.1} parent=1 // pred_fallthru
      _
    // Predicated region
    $region6: #{tpu_custom_call.1} parent=1 // pred_check
      _
    $region7: #{tpu_custom_call.1} parent=1 // pred_check_branch
      %26 = sbr.rel (0) target = $region9
    $region8: #{tpu_custom_call.1} parent=1 // pred_region
      %28 = vsyncadd [#allocation8], 0
      %s30 = sshll.u32 %s1, 4
      %s31 = int_to_ptr.hbm [resolvable:$true] %s30
      %33 = dma.hbm_to_smem %s31, 16, [#allocation7], [#allocation8]
    $region9: #{tpu_custom_call.1} parent=1 // pred_fallthru
      _
    // Predicated region
    $region10: #{tpu_custom_call.1} parent=1 // pred_check
      _
    $region11: #{tpu_custom_call.1} parent=1 // pred_check_branch
      %35 = sbr.rel (0) target = $region13
    $region12: #{tpu_custom_call.1} parent=1 // pred_region
      %37 = vsyncadd [#allocation6], 0
      %s39 = sshll.u32 %s2, 4
      %s40 = int_to_ptr.vmem [resolvable:$true] %s39
      %42 = dma.vmem_to_smem %s40, 16, [#allocation9], [#allocation6]
    $region13: #{tpu_custom_call.1} parent=1 // pred_fallthru
      _
    // Predicated region
    $region14: #{tpu_custom_call.1} parent=1 // pred_check
      _
    $region15: #{tpu_custom_call.1} parent=1 // pred_check_branch
      %44 = sbr.rel (0) target = $region17
    $region16: #{tpu_custom_call.1} parent=1 // pred_region
      %46 = vsyncadd [#allocation11], 0
      %s48 = sshll.u32 %s3, 4
      %s49 = int_to_ptr.vmem [resolvable:$true] %s48
      %51 = dma.vmem_to_smem %s49, 16, [#allocation10], [#allocation11]
    $region17: #{tpu_custom_call.1} parent=1 // pred_fallthru
      _
    // Predicated region
    $region18: #{tpu_custom_call.1} parent=1 // pred_check
      _
    $region19: #{tpu_custom_call.1} parent=1 // pred_check_branch
      %53 = sbr.rel (0) target = $region21
    $region20: #{tpu_custom_call.1} parent=1 // pred_region
      %55 = vsyncadd [#allocation3], 0
      %s56 = sshll.u32 %s4, 4
      %s57 = int_to_ptr.hbm [resolvable:$true] %s56
      %s58 = sshll.u32 [#allocation12], 4
      %s59 = int_to_ptr.vmem [resolvable:$true] %s58
      %64 = dma.hbm_to_vmem [thread:$0]  %s57, 384, %s59, [#allocation3], 128, 128, 8
    $region21: #{tpu_custom_call.1} parent=1 // pred_fallthru
      _
    // Predicated region
    $region22: #{tpu_custom_call.1} parent=1 // pred_check
      _
    $region23: #{tpu_custom_call.1} parent=1 // pred_check_branch
      %66 = sbr.rel (0) target = $region25
    $region24: #{tpu_custom_call.1} parent=1 // pred_region
      %68 = dma.done [#allocation5], 16
    $region25: #{tpu_custom_call.1} parent=1 // pred_fallthru
      _
    // Predicated region
    $region26: #{tpu_custom_call.1} parent=1 // pred_check
      _
    $region27: #{tpu_custom_call.1} parent=1 // pred_check_branch
      %70 = sbr.rel (0) target = $region29
    $region28: #{tpu_custom_call.1} parent=1 // pred_region
      %72 = dma.done [#allocation8], 16
    $region29: #{tpu_custom_call.1} parent=1 // pred_fallthru
      _
    // Predicated region
    $region30: #{tpu_custom_call.1} parent=1 // pred_check
      _
    $region31: #{tpu_custom_call.1} parent=1 // pred_check_branch
      %74 = sbr.rel (0) target = $region33
    $region32: #{tpu_custom_call.1} parent=1 // pred_region
      %76 = dma.done [#allocation6], 16
    $region33: #{tpu_custom_call.1} parent=1 // pred_fallthru
      _
    // Predicated region
    $region34: #{tpu_custom_call.1} parent=1 // pred_check
      _
    $region35: #{tpu_custom_call.1} parent=1 // pred_check_branch
      %78 = sbr.rel (0) target = $region37
    $region36: #{tpu_custom_call.1} parent=1 // pred_region
      %80 = dma.done [#allocation11], 16
    $region37: #{tpu_custom_call.1} parent=1 // pred_fallthru
      _
    // Predicated region
    $region38: #{tpu_custom_call.1} parent=1 // pred_check
      _
    $region39: #{tpu_custom_call.1} parent=1 // pred_check_branch
      %82 = sbr.rel (0) target = $region41
    $region40: #{tpu_custom_call.1} parent=1 // pred_region
      %84 = dma.done [#allocation3], 384
    $region41: #{tpu_custom_call.1} parent=1 // pred_fallthru
      _
    %85 = sfence
    %v86 = vld [vmem:[#allocation12] sm:$0xff]
    %s87 = scalar_lea.vmem [#allocation12], 8
    %v88 = vld [vmem:[%s87] sm:$0xff]
    %s89 = scalar_lea.vmem [#allocation12], 16
    %v90 = vld [vmem:[%s89] sm:$0xff]
    %s91 = sld [smem:[#allocation7]]
    %s92 = sld [smem:[#allocation2]]
    %v93 = vstv %s92
    %v94 = vmul.f32 %v93, %v86
    %v95 = vstv %s91
    %v96 = vadd.f32 %v95, %v94
    %s97 = sld [smem:[#allocation2 + $0x1]]
    %v98 = vstv %s97
    %v99 = vmul.f32 %v98, %v88
    %v100 = vadd.f32 %v96, %v99
    %s101 = sld [smem:[#allocation2 + $0x2]]
    %v102 = vstv %s101
    %v103 = vmul.f32 %v102, %v90
    %v104 = vadd.f32 %v100, %v103
    %v105 = vmax.f32 %v104, 0.0
    %s106 = sld [smem:[#allocation7 + $0x1]]
    %s107 = sld [smem:[#allocation2 + $0x3]]
    %v108 = vstv %s107
    %v109 = vmul.f32 %v108, %v86
    %v110 = vstv %s106
    %v111 = vadd.f32 %v110, %v109
    %s112 = sld [smem:[#allocation2 + $0x4]]
    %v113 = vstv %s112
    %v114 = vmul.f32 %v113, %v88
    %v115 = vadd.f32 %v111, %v114
    %s116 = sld [smem:[#allocation2 + $0x5]]
    %v117 = vstv %s116
    %v118 = vmul.f32 %v117, %v90
    %v119 = vadd.f32 %v115, %v118
    %v120 = vmax.f32 %v119, 0.0
    %s121 = sld [smem:[#allocation7 + $0x2]]
    %s122 = sld [smem:[#allocation2 + $0x6]]
    %v123 = vstv %s122
    %v124 = vmul.f32 %v123, %v86
    %v125 = vstv %s121
    %v126 = vadd.f32 %v125, %v124
    %s127 = sld [smem:[#allocation2 + $0x7]]
    %v128 = vstv %s127
    %v129 = vmul.f32 %v128, %v88
    %v130 = vadd.f32 %v126, %v129
    %s131 = sld [smem:[#allocation2 + $0x8]]
    %v132 = vstv %s131
    %v133 = vmul.f32 %v132, %v90
    %v134 = vadd.f32 %v130, %v133
    %v135 = vmax.f32 %v134, 0.0
    %s136 = sld [smem:[#allocation7 + $0x3]]
    %s137 = sld [smem:[#allocation2 + $0x9]]
    %v138 = vstv %s137
    %v139 = vmul.f32 %v138, %v86
    %v140 = vstv %s136
    %v141 = vadd.f32 %v140, %v139
    %s142 = sld [smem:[#allocation2 + $0xa]]
    %v143 = vstv %s142
    %v144 = vmul.f32 %v143, %v88
    %v145 = vadd.f32 %v141, %v144
    %s146 = sld [smem:[#allocation2 + $0xb]]
    %v147 = vstv %s146
    %v148 = vmul.f32 %v147, %v90
    %v149 = vadd.f32 %v145, %v148
    %v150 = vmax.f32 %v149, 0.0
    %s151 = sld [smem:[#allocation7 + $0x4]]
    %s152 = sld [smem:[#allocation2 + $0xc]]
    %v153 = vstv %s152
    %v154 = vmul.f32 %v153, %v86
    %v155 = vstv %s151
    %v156 = vadd.f32 %v155, %v154
    %s157 = sld [smem:[#allocation2 + $0xd]]
    %v158 = vstv %s157
    %v159 = vmul.f32 %v158, %v88
    %v160 = vadd.f32 %v156, %v159
    %s161 = sld [smem:[#allocation2 + $0xe]]
    %v162 = vstv %s161
    %v163 = vmul.f32 %v162, %v90
    %v164 = vadd.f32 %v160, %v163
    %v165 = vmax.f32 %v164, 0.0
    %s166 = sld [smem:[#allocation10]]
    %s167 = sld [smem:[#allocation9]]
    %v168 = vstv %s167
    %v169 = vmul.f32 %v168, %v105
    %v170 = vstv %s166
    %v171 = vadd.f32 %v170, %v169
    %s172 = sld [smem:[#allocation9 + $0x1]]
    %v173 = vstv %s172
    %v174 = vmul.f32 %v173, %v120
    %v175 = vadd.f32 %v171, %v174
    %s176 = sld [smem:[#allocation9 + $0x2]]
    %v177 = vstv %s176
    %v178 = vmul.f32 %v177, %v135
    %v179 = vadd.f32 %v175, %v178
    %s180 = sld [smem:[#allocation9 + $0x3]]
    %v181 = vstv %s180
    %v182 = vmul.f32 %v181, %v150
    %v183 = vadd.f32 %v179, %v182
    %s184 = sld [smem:[#allocation9 + $0x4]]
    %v185 = vstv %s184
    %v186 = vmul.f32 %v185, %v165
    %v187 = vadd.f32 %v183, %v186
    %188 = vst [vmem:[#allocation13] sm:$0xff] %v187
    %s189 = sld [smem:[#allocation10 + $0x1]]
    %s190 = sld [smem:[#allocation9 + $0x5]]
    %v191 = vstv %s190
    %v192 = vmul.f32 %v191, %v105
    %v193 = vstv %s189
    %v194 = vadd.f32 %v193, %v192
    %s195 = sld [smem:[#allocation9 + $0x6]]
    %v196 = vstv %s195
    %v197 = vmul.f32 %v196, %v120
    %v198 = vadd.f32 %v194, %v197
    %s199 = sld [smem:[#allocation9 + $0x7]]
    %v200 = vstv %s199
    %v201 = vmul.f32 %v200, %v135
    %v202 = vadd.f32 %v198, %v201
    %s203 = sld [smem:[#allocation9 + $0x8]]
    %v204 = vstv %s203
    %v205 = vmul.f32 %v204, %v150
    %v206 = vadd.f32 %v202, %v205
    %s207 = sld [smem:[#allocation9 + $0x9]]
    %v208 = vstv %s207
    %v209 = vmul.f32 %v208, %v165
    %v210 = vadd.f32 %v206, %v209
    %s211 = scalar_lea.vmem [#allocation13], 8
    %212 = vst [vmem:[%s211] sm:$0xff] %v210
    // Predicated region
    $region42: #{tpu_custom_call.1} parent=1 // pred_check
      _
    $region43: #{tpu_custom_call.1} parent=1 // pred_check_branch
      %214 = sbr.rel (0) target = $region45
    $region44: #{tpu_custom_call.1} parent=1 // pred_region
      %216 = vsyncadd [#allocation4], 0
      %s217 = sshll.u32 [#allocation13], 4
      %s218 = int_to_ptr.vmem [resolvable:$true] %s217
      %s219 = sshll.u32 %s5, 4
      %s220 = int_to_ptr.hbm [resolvable:$true] %s219
      %225 = dma.vmem_to_hbm [thread:$0]  %s218, 256, %s220, [#allocation4], 128, 128, 8
    $region45: #{tpu_custom_call.1} parent=1 // pred_fallthru
      _
    // Predicated region
    $region46: #{tpu_custom_call.1} parent=1 // pred_check
      _
    $region47: #{tpu_custom_call.1} parent=1 // pred_check_branch
      %227 = sbr.rel (0) target = $region49
    $region48: #{tpu_custom_call.1} parent=1 // pred_region
      %229 = dma.done [#allocation4], 256
    $region49: #{tpu_custom_call.1} parent=1 // pred_fallthru
      _
    %230 = vsyncpa [#allocation3], 1
    %231 = vsyncpa [#allocation4], 1
    %232 = vsyncpa [#allocation5], 1
    %233 = vsyncpa [#allocation8], 1
    %234 = vsyncpa [#allocation6], 1
    %235 = vsyncpa [#allocation11], 1

</llo_original>
